<compile_context>
chip_gen: v5e
topology: v5e:2x2
jax: 0.10.0
libtpu: 0.0.40
codegen_flags: <defaults>
</compile_context>

<pallas_src>
import jax
import jax.numpy as jnp
from jax.experimental import pallas as pl
from jax.experimental.pallas import tpu as pltpu


def _outconv_kernel(w_ref, b_ref, x_ref, o_ref):
    # w_ref: (Cout, Cin) f32 in SMEM; b_ref: (Cout,) f32 in SMEM
    # x_ref: (1, Cin, T) VMEM block; o_ref: (1, Cout, T) VMEM block
    cin = x_ref.shape[1]
    cout = o_ref.shape[1]

    # Load each input-channel row once (lane-dense (1, T) vectors).
    xs = [x_ref[0, ci:ci + 1, :].astype(jnp.float32) for ci in range(cin)]

    rows = []
    for co in range(cout):
        acc = xs[0] * w_ref[co, 0]
        for ci in range(1, cin):
            acc = acc + xs[ci] * w_ref[co, ci]
        rows.append(acc + b_ref[co])

    # Single full-block, lane-dense store.
    o_ref[0] = jnp.concatenate(rows, axis=0).astype(o_ref.dtype)


def outconv_pallas(x_nchw, weight, bias, *, tile_cap=8192):
    """1x1 Conv2d forward (PyTorch OutConv semantics).

    x_nchw: (N, Cin, H, W)
    weight: (Cout, Cin, 1, 1)   (PyTorch Conv2d weight layout)
    bias:   (Cout,)
    returns (N, Cout, H, W)
    """
    N, Cin, H, W = x_nchw.shape
    Cout = weight.shape[0]
    HW = H * W

    # Free reshapes -- no transposes, no extra HBM passes.
    x_flat = x_nchw.reshape(N, Cin, HW)
    w_mat = weight.reshape(Cout, Cin).astype(jnp.float32)
    b_vec = bias.reshape(Cout).astype(jnp.float32)

    # --- pick the spatial (lane) tile -------------------------------------
    # Keep double-buffered input+output blocks within a modest VMEM budget so
    # the same tile choice is safe on v7x (64 MiB VMEM / 32 MiB scoped default).
    itemsize = jnp.dtype(x_nchw.dtype).itemsize
    bytes_per_lane = 2 * (Cin + Cout) * itemsize  # x2 for double buffering
    max_tile = max(128, (8 * 1024 * 1024 // max(bytes_per_lane, 1)) // 128 * 128)
    cap = max(128, min(tile_cap, max_tile))

    if HW <= cap:
        tile = HW                      # full-dim block (exempt from 128 rule)
        HW_pad = HW
    else:
        tile = 0
        t = (cap // 128) * 128
        while t >= 128:                # largest multiple of 128 that divides HW
            if HW % t == 0:
                tile = t
                break
            t -= 128
        if tile:
            HW_pad = HW                # no padding needed
        else:
            tile = (cap // 128) * 128  # rare ragged case: pad the tail
            HW_pad = -(-HW // tile) * tile

    if HW_pad != HW:
        x_flat = jnp.pad(x_flat, ((0, 0), (0, 0), (0, HW_pad - HW)))

    grid = (N, HW_pad // tile)

    out_flat = pl.pallas_call(
        _outconv_kernel,
        out_shape=jax.ShapeDtypeStruct((N, Cout, HW_pad), x_nchw.dtype),
        grid_spec=pltpu.PrefetchScalarGridSpec(
            num_scalar_prefetch=0,
            grid=grid,
            in_specs=[
                # Tiny, grid-invariant params live in SMEM (scalar reads).
                pl.BlockSpec(memory_space=pltpu.MemorySpace.SMEM),  # weights
                pl.BlockSpec(memory_space=pltpu.MemorySpace.SMEM),  # bias
                # Activations: spatial axis on lanes, channels on sublanes.
                pl.BlockSpec((1, Cin, tile), lambda n, j: (n, 0, j)),
            ],
            out_specs=pl.BlockSpec((1, Cout, tile), lambda n, j: (n, 0, j)),
        ),
        compiler_params=pltpu.CompilerParams(
            dimension_semantics=("parallel", "parallel")),
    )(w_mat, b_vec, x_flat)

    if HW_pad != HW:
        out_flat = out_flat[:, :, :HW]
    return out_flat.reshape(N, Cout, H, W)


if __name__ == "__main__":
    key = jax.random.PRNGKey(0)
    kx, kw, kb = jax.random.split(key, 3)

    # Shapes consistent with OutConv(in_channels=4, out_channels=3)
    N, Cin, H, W = 2, 4, 16, 16
    Cout = 3

    x = jax.random.normal(kx, (N, Cin, H, W), dtype=jnp.float32)
    # Deterministic param init (kaiming-uniform-ish bound like PyTorch Conv2d)
    bound = 1.0 / (Cin ** 0.5)
    weight = jax.random.uniform(kw, (Cout, Cin, 1, 1), jnp.float32, -bound, bound)
    bias = jax.random.uniform(kb, (Cout,), jnp.float32, -bound, bound)

    out = jax.block_until_ready(outconv_pallas(x, weight, bias))

    # Reference: plain JAX 1x1 conv
    ref = jnp.einsum("nchw,oc->nohw", x, weight.reshape(Cout, Cin)) \
        + bias[None, :, None, None]
    assert out.shape == (N, Cout, H, W)
    assert jnp.allclose(out, ref, atol=1e-5, rtol=1e-5), "mismatch vs reference"

    print("KERNEL_OK")
</pallas_src>

<mosaic_0001>
module attributes {stable_mosaic.version = 11 : i64} {
  func.func @_outconv_kernel(%arg0: i32, %arg1: i32, %arg2: memref<3x4xf32, #tpu.memory_space<smem>>, %arg3: memref<3xf32, #tpu.memory_space<smem>>, %arg4: memref<1x4x256xf32, #tpu.memory_space<vmem>>, %arg5: memref<1x3x256xf32, #tpu.memory_space<vmem>>) attributes {dimension_semantics = [#tpu.dimension_semantics<parallel>, #tpu.dimension_semantics<parallel>], iteration_bounds = array<i64: 2, 1>, scalar_prefetch = 0 : i64, scratch_operands = 0 : i64, tpu.core_type = #tpu.core_type<tc>, window_params = [{transform_indices = @transform_0, window_bounds = array<i64: 3, 4>}, {transform_indices = @transform_1, window_bounds = array<i64: 3>}, {transform_indices = @transform_2, window_bounds = array<i64: 1, 4, 256>}, {transform_indices = @transform_3, window_bounds = array<i64: 1, 3, 256>}]} {
    %c0 = arith.constant 0 : index
    %c0_0 = arith.constant 0 : index
    %c0_1 = arith.constant 0 : index
    %0 = vector.load %arg4[%c0, %c0_0, %c0_1] : memref<1x4x256xf32, #tpu.memory_space<vmem>>, vector<1x1x256xf32>
    %1 = vector.shape_cast %0 : vector<1x1x256xf32> to vector<1x256xf32>
    %c0_2 = arith.constant 0 : index
    %c1 = arith.constant 1 : index
    %c0_3 = arith.constant 0 : index
    %2 = vector.load %arg4[%c0_2, %c1, %c0_3] : memref<1x4x256xf32, #tpu.memory_space<vmem>>, vector<1x1x256xf32>
    %3 = vector.shape_cast %2 : vector<1x1x256xf32> to vector<1x256xf32>
    %c0_4 = arith.constant 0 : index
    %c2 = arith.constant 2 : index
    %c0_5 = arith.constant 0 : index
    %4 = vector.load %arg4[%c0_4, %c2, %c0_5] : memref<1x4x256xf32, #tpu.memory_space<vmem>>, vector<1x1x256xf32>
    %5 = vector.shape_cast %4 : vector<1x1x256xf32> to vector<1x256xf32>
    %c0_6 = arith.constant 0 : index
    %c3 = arith.constant 3 : index
    %c0_7 = arith.constant 0 : index
    %6 = vector.load %arg4[%c0_6, %c3, %c0_7] : memref<1x4x256xf32, #tpu.memory_space<vmem>>, vector<1x1x256xf32>
    %7 = vector.shape_cast %6 : vector<1x1x256xf32> to vector<1x256xf32>
    %c0_8 = arith.constant 0 : index
    %c0_9 = arith.constant 0 : index
    %8 = memref.load %arg2[%c0_8, %c0_9] : memref<3x4xf32, #tpu.memory_space<smem>>
    %9 = vector.broadcast %8 : f32 to vector<1x256xf32>
    %10 = arith.mulf %1, %9 : vector<1x256xf32>
    %c0_10 = arith.constant 0 : index
    %c1_11 = arith.constant 1 : index
    %11 = memref.load %arg2[%c0_10, %c1_11] : memref<3x4xf32, #tpu.memory_space<smem>>
    %12 = vector.broadcast %11 : f32 to vector<1x256xf32>
    %13 = arith.mulf %3, %12 : vector<1x256xf32>
    %14 = arith.addf %10, %13 : vector<1x256xf32>
    %c0_12 = arith.constant 0 : index
    %c2_13 = arith.constant 2 : index
    %15 = memref.load %arg2[%c0_12, %c2_13] : memref<3x4xf32, #tpu.memory_space<smem>>
    %16 = vector.broadcast %15 : f32 to vector<1x256xf32>
    %17 = arith.mulf %5, %16 : vector<1x256xf32>
    %18 = arith.addf %14, %17 : vector<1x256xf32>
    %c0_14 = arith.constant 0 : index
    %c3_15 = arith.constant 3 : index
    %19 = memref.load %arg2[%c0_14, %c3_15] : memref<3x4xf32, #tpu.memory_space<smem>>
    %20 = vector.broadcast %19 : f32 to vector<1x256xf32>
    %21 = arith.mulf %7, %20 : vector<1x256xf32>
    %22 = arith.addf %18, %21 : vector<1x256xf32>
    %c0_16 = arith.constant 0 : index
    %23 = memref.load %arg3[%c0_16] : memref<3xf32, #tpu.memory_space<smem>>
    %24 = vector.broadcast %23 : f32 to vector<1x256xf32>
    %25 = arith.addf %22, %24 : vector<1x256xf32>
    %c1_17 = arith.constant 1 : index
    %c0_18 = arith.constant 0 : index
    %26 = memref.load %arg2[%c1_17, %c0_18] : memref<3x4xf32, #tpu.memory_space<smem>>
    %27 = vector.broadcast %26 : f32 to vector<1x256xf32>
    %28 = arith.mulf %1, %27 : vector<1x256xf32>
    %c1_19 = arith.constant 1 : index
    %c1_20 = arith.constant 1 : index
    %29 = memref.load %arg2[%c1_19, %c1_20] : memref<3x4xf32, #tpu.memory_space<smem>>
    %30 = vector.broadcast %29 : f32 to vector<1x256xf32>
    %31 = arith.mulf %3, %30 : vector<1x256xf32>
    %32 = arith.addf %28, %31 : vector<1x256xf32>
    %c1_21 = arith.constant 1 : index
    %c2_22 = arith.constant 2 : index
    %33 = memref.load %arg2[%c1_21, %c2_22] : memref<3x4xf32, #tpu.memory_space<smem>>
    %34 = vector.broadcast %33 : f32 to vector<1x256xf32>
    %35 = arith.mulf %5, %34 : vector<1x256xf32>
    %36 = arith.addf %32, %35 : vector<1x256xf32>
    %c1_23 = arith.constant 1 : index
    %c3_24 = arith.constant 3 : index
    %37 = memref.load %arg2[%c1_23, %c3_24] : memref<3x4xf32, #tpu.memory_space<smem>>
    %38 = vector.broadcast %37 : f32 to vector<1x256xf32>
    %39 = arith.mulf %7, %38 : vector<1x256xf32>
    %40 = arith.addf %36, %39 : vector<1x256xf32>
    %c1_25 = arith.constant 1 : index
    %41 = memref.load %arg3[%c1_25] : memref<3xf32, #tpu.memory_space<smem>>
    %42 = vector.broadcast %41 : f32 to vector<1x256xf32>
    %43 = arith.addf %40, %42 : vector<1x256xf32>
    %c2_26 = arith.constant 2 : index
    %c0_27 = arith.constant 0 : index
    %44 = memref.load %arg2[%c2_26, %c0_27] : memref<3x4xf32, #tpu.memory_space<smem>>
    %45 = vector.broadcast %44 : f32 to vector<1x256xf32>
    %46 = arith.mulf %1, %45 : vector<1x256xf32>
    %c2_28 = arith.constant 2 : index
    %c1_29 = arith.constant 1 : index
    %47 = memref.load %arg2[%c2_28, %c1_29] : memref<3x4xf32, #tpu.memory_space<smem>>
    %48 = vector.broadcast %47 : f32 to vector<1x256xf32>
    %49 = arith.mulf %3, %48 : vector<1x256xf32>
    %50 = arith.addf %46, %49 : vector<1x256xf32>
    %c2_30 = arith.constant 2 : index
    %c2_31 = arith.constant 2 : index
    %51 = memref.load %arg2[%c2_30, %c2_31] : memref<3x4xf32, #tpu.memory_space<smem>>
    %52 = vector.broadcast %51 : f32 to vector<1x256xf32>
    %53 = arith.mulf %5, %52 : vector<1x256xf32>
    %54 = arith.addf %50, %53 : vector<1x256xf32>
    %c2_32 = arith.constant 2 : index
    %c3_33 = arith.constant 3 : index
    %55 = memref.load %arg2[%c2_32, %c3_33] : memref<3x4xf32, #tpu.memory_space<smem>>
    %56 = vector.broadcast %55 : f32 to vector<1x256xf32>
    %57 = arith.mulf %7, %56 : vector<1x256xf32>
    %58 = arith.addf %54, %57 : vector<1x256xf32>
    %c2_34 = arith.constant 2 : index
    %59 = memref.load %arg3[%c2_34] : memref<3xf32, #tpu.memory_space<smem>>
    %60 = vector.broadcast %59 : f32 to vector<1x256xf32>
    %61 = arith.addf %58, %60 : vector<1x256xf32>
    %62 = tpu.concatenate %25, %43, %61 in 0 : vector<1x256xf32>, vector<1x256xf32>, vector<1x256xf32> -> vector<3x256xf32>
    %c0_35 = arith.constant 0 : index
    %c0_36 = arith.constant 0 : index
    %c0_37 = arith.constant 0 : index
    %63 = vector.load %arg5[%c0_35, %c0_36, %c0_37] : memref<1x3x256xf32, #tpu.memory_space<vmem>>, vector<1x3x256xf32>
    %64 = vector.shape_cast %63 : vector<1x3x256xf32> to vector<3x256xf32>
    %65 = vector.shape_cast %62 : vector<3x256xf32> to vector<1x3x256xf32>
    tpu.vector_store %arg5[%c0_35, %c0_36, %c0_37], %65 {strides = array<i32>} : memref<1x3x256xf32, #tpu.memory_space<vmem>>, vector<1x3x256xf32>,
    return
  }
  func.func @transform_0(%arg0: i32, %arg1: i32) -> (i32, i32) {
    %c0_i32 = arith.constant 0 : i32
    %c0_i32_0 = arith.constant 0 : i32
    %c0_i32_1 = arith.constant 0 : i32
    return %c0_i32, %c0_i32_0 : i32, i32
  }
  func.func @transform_1(%arg0: i32, %arg1: i32) -> i32 {
    %c0_i32 = arith.constant 0 : i32
    %c0_i32_0 = arith.constant 0 : i32
    return %c0_i32 : i32
  }
  func.func @transform_2(%arg0: i32, %arg1: i32) -> (i32, i32, i32) {
    %c0_i32 = arith.constant 0 : i32
    %c0_i32_0 = arith.constant 0 : i32
    return %arg0, %c0_i32, %arg1 : i32, i32, i32
  }
  func.func @transform_3(%arg0: i32, %arg1: i32) -> (i32, i32, i32) {
    %c0_i32 = arith.constant 0 : i32
    %c0_i32_0 = arith.constant 0 : i32
    return %arg0, %c0_i32, %arg1 : i32, i32, i32
  }
}

</mosaic_0001>

<llo_original>
// kernel: tpu_custom_call.1
$region0: #{tpu_custom_call.1}
  #allocation0 [shape = 'u32[]', space=smem, size = 0x4, offset = 0x4, fixed_abs, tag = 'smem constant byte address 0x4 - core index']
  #allocation1 [shape = 'u32[72,128]{1,0:T(1,128)}', space=vmem, size = 0x9000, scoped, tag = 'internal scratch']
  %s0 = inlined_call_operand.hbm [shape: f32[3,4], index: 0, kind: input, shape index: {}]
  %s1 = inlined_call_operand.hbm [shape: f32[3], index: 1, kind: input, shape index: {}]
  %s2 = inlined_call_operand.hbm [shape: f32[2,4,256], index: 2, kind: input, shape index: {}]
  %s3 = inlined_call_operand.vmem [shape: f32[2,3,256], index: 3, kind: output, shape index: {}]
  %s4 = sld [smem:[#allocation0]]
  $region57: #{tpu_custom_call.1} parent=0
    _
  %s6 = ssub.s32 1, %s4
  %s7 = scalar_select 0, %s6, %s4
  $region1: #{tpu_custom_call.1} parent=0
    #allocation2 [shape = 'u8[2048]{0}', space=smem, size = 0x800, scoped, tag = 'input window, operand 0, single buffered']
    #allocation3 [shape = 's32[2]{0}', space=sflag, size = 0x8, scoped, tag = 'scoped memory for tpu_custom_call.1']
    #allocation4 [shape = 's32[2]{0}', space=sflag, size = 0x8, scoped, tag = 'scoped memory for tpu_custom_call.1']
    #allocation5 [shape = 'u8[512]{0}', space=smem, size = 0x200, scoped, tag = 'input window, operand 1, single buffered']
    #allocation6 [shape = 's32[1]{0}', space=sflag, size = 0x4, scoped, tag = 'scoped memory for tpu_custom_call.1']
    #allocation7 [shape = 'u8[8192]{0}', space=vmem, size = 0x2000, scoped, tag = 'input window, operand 2']
    %8 = vsyncpa [#allocation4], 0
    %9 = vsyncpa [#allocation6], 0
    %10 = vsyncpa [#allocation3], 0
    %s11 = scalar_lea.sflag [#allocation3], 1
    %12 = vsyncpa %s11, 0
    loop: start=0, step=1, limit=4
    $region2: #{tpu_custom_call.1} parent=1 // loop_pre_header
      _
    $region3: #{tpu_custom_call.1} parent=1 // loop_header
      %s14 = sphi 0, %s18
      %p15 = scmp.ge.s32.totalorder %s14, 4
      %s21 = sphi 0, %s33
      %s22 = sphi 0, %s29
      %s23 = sphi 0, %s21
      %s24 = sphi 0, %s22
      %s25 = sphi 0, %s23
      %s26 = sphi 0, %s24
      %s34 = sphi 0, %s34
      %s36 = sphi 0, %s34
      %s37 = sphi 0, %s36
      %s51 = sphi 0, %s37
      %s55 = sphi 0, %s55
      %s57 = sphi 0, %s55
      %s58 = sphi 0, %s57
      %s72 = sphi 0, %s58
      %s80 = sphi 0, %s82
      %s83 = sphi 0, %s80
      %s84 = sphi 0, %s83
      %s100 = sphi 0, %s84
      %s108 = sphi 0, %s110
      %s111 = sphi 0, %s108
      %s112 = sphi 0, %s111
      %s128 = sphi 0, %s112
    $region4: #{tpu_custom_call.1} parent=1 // loop_header_branch
      %17 = sbr.rel (%p15) target = $region8
    $region5: #{tpu_custom_call.1} parent=1 // loop_body
      %s19 = ssub.s32 %s14, 1
      %s20 = ssub.s32 %s14, 2
      %s27 = sadd.s32 1, %s22
      %p28 = scmp.ge.s32.totalorder %s27, 1
      %s29 = scalar_select %p28, 0, %s27
      %s30 = sadd.s32 1, %s21
      %s31 = scalar_select %p28, %s30, %s21
      %p32 = scmp.ge.s32.totalorder %s31, 2
      %s33 = scalar_select %p32, 0, %s31
      %s35 = sadd.s32 %s34, 1
      %p38 = scmp.eq.s32.totalorder %s14, 1
      %p39 = scmp.ne.s32.totalorder %s34, %s36
      %p40 = scmp.eq.s32.totalorder %s14, 0
      %p41 = por %p39, %p40
      %p42 = scmp.ne.s32.totalorder %s34, %s36
      %p43 = scmp.eq.s32.totalorder %s19, 1
      %p44 = por %p42, %p43
      %p45 = scmp.ne.s32.totalorder %s36, %s37
      %p46 = scmp.eq.s32.totalorder %s19, 0
      %p47 = por %p45, %p46
      %p48 = scmp.ne.s32.totalorder %s36, %s37
      %p49 = scmp.eq.s32.totalorder %s20, 1
      %p50 = por %p48, %p49
      %p52 = scmp.ne.s32.totalorder %s37, %s51
      %p53 = scmp.eq.s32.totalorder %s20, 0
      %p54 = por %p52, %p53
      %s56 = sadd.s32 %s55, 1
      %p59 = scmp.eq.s32.totalorder %s14, 1
      %p60 = scmp.ne.s32.totalorder %s55, %s57
      %p61 = scmp.eq.s32.totalorder %s14, 0
      %p62 = por %p60, %p61
      %p63 = scmp.ne.s32.totalorder %s55, %s57
      %p64 = scmp.eq.s32.totalorder %s19, 1
      %p65 = por %p63, %p64
      %p66 = scmp.ne.s32.totalorder %s57, %s58
      %p67 = scmp.eq.s32.totalorder %s19, 0
      %p68 = por %p66, %p67
      %p69 = scmp.ne.s32.totalorder %s57, %s58
      %p70 = scmp.eq.s32.totalorder %s20, 1
      %p71 = por %p69, %p70
      %p73 = scmp.ne.s32.totalorder %s58, %s72
      %p74 = scmp.eq.s32.totalorder %s20, 0
      %p75 = por %p73, %p74
      %s76 = ssub.s32 %s21, %s33
      %s77 = ssub.s32 %s22, %s29
      %s78 = sor.u32 %s76, %s77
      %p79 = scmp.eq.s32.totalorder %s78, 0
      %s81 = sadd.s32 %s80, 1
      %s82 = scalar_select %p79, %s80, %s81
      %p85 = pneg %p79
      %p86 = scmp.eq.s32.totalorder %s14, 1
      %p87 = por %p85, %p86
      %p88 = scmp.ne.s32.totalorder %s80, %s83
      %p89 = scmp.eq.s32.totalorder %s14, 0
      %p90 = por %p88, %p89
      %p91 = scmp.ne.s32.totalorder %s80, %s83
      %p92 = scmp.eq.s32.totalorder %s19, 1
      %p93 = por %p91, %p92
      %p94 = scmp.ne.s32.totalorder %s83, %s84
      %p95 = scmp.eq.s32.totalorder %s19, 0
      %p96 = por %p94, %p95
      %p97 = scmp.ne.s32.totalorder %s83, %s84
      %p98 = scmp.eq.s32.totalorder %s20, 1
      %p99 = por %p97, %p98
      %p101 = scmp.ne.s32.totalorder %s84, %s100
      %p102 = scmp.eq.s32.totalorder %s20, 0
      %p103 = por %p101, %p102
      %s104 = ssub.s32 %s21, %s33
      %s105 = ssub.s32 %s22, %s29
      %s106 = sor.u32 %s104, %s105
      %p107 = scmp.eq.s32.totalorder %s106, 0
      %s109 = sadd.s32 %s108, 1
      %s110 = scalar_select %p107, %s108, %s109
      %p113 = pneg %p107
      %p114 = scmp.eq.s32.totalorder %s14, 1
      %p115 = por %p113, %p114
      %p116 = scmp.ne.s32.totalorder %s108, %s111
      %p117 = scmp.eq.s32.totalorder %s14, 0
      %p118 = por %p116, %p117
      %p119 = scmp.ne.s32.totalorder %s108, %s111
      %p120 = scmp.eq.s32.totalorder %s19, 1
      %p121 = por %p119, %p120
      %p122 = scmp.ne.s32.totalorder %s111, %s112
      %p123 = scmp.eq.s32.totalorder %s19, 0
      %p124 = por %p122, %p123
      %p125 = scmp.ne.s32.totalorder %s111, %s112
      %p126 = scmp.eq.s32.totalorder %s20, 1
      %p127 = por %p125, %p126
      %p129 = scmp.ne.s32.totalorder %s112, %s128
      %p130 = scmp.eq.s32.totalorder %s20, 0
      %p131 = por %p129, %p130
      %p132 = scmp.le.s32.totalorder 1, %s14
      %p133 = scmp.lt.s32.totalorder %s14, 3
      %p134 = pnand %p132, %p133
      %p135 = pneg %p134
      // Predicated region
      $region9: #{tpu_custom_call.1} parent=5 // pred_check
        _
      $region10: #{tpu_custom_call.1} parent=5 // pred_check_branch
        %137 = sbr.rel (%p134) target = $region12
      $region11: #{tpu_custom_call.1} parent=5 // pred_region
        %s138 = ssub.s32 %s14, 1
        // Predicated region
        $region13: #{tpu_custom_call.1} parent=11 // pred_check
          %p139 = pneg %p47
        $region14: #{tpu_custom_call.1} parent=11 // pred_check_branch
          %141 = sbr.rel (%p139) target = $region16
        $region15: #{tpu_custom_call.1} parent=11 // pred_region
          %143 = vsyncadd [#allocation4], 0
          %s145 = sshll.u32 %s0, 4
          %s146 = int_to_ptr.hbm [resolvable:$true] %s145
          %148 = dma.hbm_to_smem %s146, 64, [#allocation2], [#allocation4]
        $region16: #{tpu_custom_call.1} parent=11 // pred_fallthru
          _
        // Predicated region
        $region17: #{tpu_custom_call.1} parent=11 // pred_check
          %p149 = pneg %p68
        $region18: #{tpu_custom_call.1} parent=11 // pred_check_branch
          %151 = sbr.rel (%p149) target = $region20
        $region19: #{tpu_custom_call.1} parent=11 // pred_region
          %153 = vsyncadd [#allocation6], 0
          %s155 = sshll.u32 %s1, 4
          %s156 = int_to_ptr.hbm [resolvable:$true] %s155
          %158 = dma.hbm_to_smem %s156, 16, [#allocation5], [#allocation6]
        $region20: #{tpu_custom_call.1} parent=11 // pred_fallthru
          _
      $region12: #{tpu_custom_call.1} parent=5 // pred_fallthru
        _
      %p159 = scmp.lt.s32.totalorder %s14, 2
      // Predicated region
      $region21: #{tpu_custom_call.1} parent=5 // pred_check
        %p160 = pneg %p159
      $region22: #{tpu_custom_call.1} parent=5 // pred_check_branch
        %162 = sbr.rel (%p160) target = $region24
      $region23: #{tpu_custom_call.1} parent=5 // pred_region
        // Predicated region
        $region25: #{tpu_custom_call.1} parent=23 // pred_check
          %p163 = pneg %p90
        $region26: #{tpu_custom_call.1} parent=23 // pred_check_branch
          %165 = sbr.rel (%p163) target = $region28
        $region27: #{tpu_custom_call.1} parent=23 // pred_region
          %s166 = sand.u32 %s80, 1
          %s167 = scalar_lea.sflag [#allocation3], %s166
          %s168 = sand.u32 %s80, 1
          %s169 = smul.addr %s168, 8
          %s170 = scalar_lea.vmem [#allocation7], %s169
          %s171 = smul.u32 2, %s22
          %173 = vsyncadd %s167, 0
          %s174 = smul.addr %s21, 2
          %s175 = sadd.s32 %s171, %s174
          %s176 = smul.addr %s175, 4
          %s177 = scalar_lea.hbm %s2, %s176
          %s179 = sshll.u32 %s177, 4
          %s180 = int_to_ptr.hbm [resolvable:$true] %s179
          %s181 = sshll.u32 %s170, 4
          %s182 = int_to_ptr.vmem [resolvable:$true] %s181
          %184 = dma.hbm_to_vmem [thread:$0]  %s180, 128, %s182, %s167
        $region28: #{tpu_custom_call.1} parent=23 // pred_fallthru
          _
      $region24: #{tpu_custom_call.1} parent=5 // pred_fallthru
        _
      %p185 = scmp.le.s32.totalorder 1, %s14
      %p186 = scmp.lt.s32.totalorder %s14, 3
      %p187 = pnand %p185, %p186
      %p188 = pneg %p187
      // Predicated region
      $region29: #{tpu_custom_call.1} parent=5 // pred_check
        _
      $region30: #{tpu_custom_call.1} parent=5 // pred_check_branch
        %190 = sbr.rel (%p187) target = $region32
      $region31: #{tpu_custom_call.1} parent=5 // pred_region
        %s191 = ssub.s32 %s14, 1
        // Predicated region
        $region33: #{tpu_custom_call.1} parent=31 // pred_check
          %p192 = pneg %p47
        $region34: #{tpu_custom_call.1} parent=31 // pred_check_branch
          %194 = sbr.rel (%p192) target = $region36
        $region35: #{tpu_custom_call.1} parent=31 // pred_region
          %196 = dma.done [#allocation4], 64
        $region36: #{tpu_custom_call.1} parent=31 // pred_fallthru
          _
        // Predicated region
        $region37: #{tpu_custom_call.1} parent=31 // pred_check
          %p197 = pneg %p68
        $region38: #{tpu_custom_call.1} parent=31 // pred_check_branch
          %199 = sbr.rel (%p197) target = $region40
        $region39: #{tpu_custom_call.1} parent=31 // pred_region
          %201 = dma.done [#allocation6], 16
        $region40: #{tpu_custom_call.1} parent=31 // pred_fallthru
          _
        %s202 = sand.u32 %s83, 1
        %s203 = scalar_lea.sflag [#allocation3], %s202
        %s204 = sand.u32 %s83, 1
        %s205 = smul.addr %s204, 8
        %s206 = scalar_lea.vmem [#allocation7], %s205
        // Predicated region
        $region41: #{tpu_custom_call.1} parent=31 // pred_check
          %p207 = pneg %p96
        $region42: #{tpu_custom_call.1} parent=31 // pred_check_branch
          %209 = sbr.rel (%p207) target = $region44
        $region43: #{tpu_custom_call.1} parent=31 // pred_region
          %211 = dma.done %s203, 128
        $region44: #{tpu_custom_call.1} parent=31 // pred_fallthru
          _
        %212 = sfence
        %p213 = pneg %p47
        %p214 = pneg %p44
        %p215 = pneg %p68
        %p216 = pneg %p65
        %s217 = sand.u32 %s83, 1
        %s218 = scalar_lea.sflag [#allocation3], %s217
        %s219 = sand.u32 %s83, 1
        %s220 = smul.addr %s219, 8
        %s221 = scalar_lea.vmem [#allocation7], %s220
        %p222 = pneg %p96
        %p223 = pneg %p93
        %p224 = pneg %p124
        %p225 = pneg %p121
        %s226 = smul.u32 2, %s24
        %p227 = scmp.lt.s32.totalorder %s23, 1
        %s228 = scalar_select %p227, %s23, 1
        %p229 = scmp.lt.s32.totalorder %s226, 1
        %s230 = scalar_select %p229, %s226, 1
        %s231 = smul.addr %s228, 2
        %s232 = sadd.s32 %s230, %s231
        %s233 = smul.addr %s232, 4
        %s234 = scalar_lea.vmem %s3, %s233
        %s235 = smul.u32 2, %s24
        %s236 = smul.u32 2, %s24
        %p237 = scmp.lt.s32.totalorder %s23, 1
        %s238 = scalar_select %p237, %s23, 1
        %p239 = scmp.lt.s32.totalorder %s236, 1
        %s240 = scalar_select %p239, %s236, 1
        %s241 = smul.addr %s238, 2
        %s242 = sadd.s32 %s240, %s241
        %s243 = smul.addr %s242, 4
        %s244 = scalar_lea.vmem %s3, %s243
        %s245 = smul.u32 2, %s24
        %v246 = vld [vmem:[%s206] ss:$4 sm:$0x3]
        %s247 = scalar_lea.vmem %s206, 1 [#allocation7]
        %v248 = vld [vmem:[%s247] ss:$4 sm:$0x3]
        %s249 = scalar_lea.vmem %s206, 2 [#allocation7]
        %v250 = vld [vmem:[%s249] ss:$4 sm:$0x3]
        %s251 = scalar_lea.vmem %s206, 3 [#allocation7]
        %v252 = vld [vmem:[%s251] ss:$4 sm:$0x3]
        %s253 = sld [smem:[#allocation2]]
        %v254 = vstv %s253
        %v255 = vmul.f32 %v246, %v254
        %s256 = sld [smem:[#allocation2 + $0x1]]
        %v257 = vstv %s256
        %v258 = vmul.f32 %v248, %v257
        %v259 = vadd.f32 %v255, %v258
        %s260 = sld [smem:[#allocation2 + $0x2]]
        %v261 = vstv %s260
        %v262 = vmul.f32 %v250, %v261
        %v263 = vadd.f32 %v259, %v262
        %s264 = sld [smem:[#allocation2 + $0x3]]
        %v265 = vstv %s264
        %v266 = vmul.f32 %v252, %v265
        %v267 = vadd.f32 %v263, %v266
        %s268 = sld [smem:[#allocation5]]
        %v269 = vstv %s268
        %v270 = vadd.f32 %v267, %v269
        %s271 = sld [smem:[#allocation2 + $0x80]]
        %v272 = vstv %s271
        %v273 = vmul.f32 %v246, %v272
        %s274 = sld [smem:[#allocation2 + $0x81]]
        %v275 = vstv %s274
        %v276 = vmul.f32 %v248, %v275
        %v277 = vadd.f32 %v273, %v276
        %s278 = sld [smem:[#allocation2 + $0x82]]
        %v279 = vstv %s278
        %v280 = vmul.f32 %v250, %v279
        %v281 = vadd.f32 %v277, %v280
        %s282 = sld [smem:[#allocation2 + $0x83]]
        %v283 = vstv %s282
        %v284 = vmul.f32 %v252, %v283
        %v285 = vadd.f32 %v281, %v284
        %s286 = sld [smem:[#allocation5 + $0x1]]
        %v287 = vstv %s286
        %v288 = vadd.f32 %v285, %v287
        %s289 = sld [smem:[#allocation2 + $0x100]]
        %v290 = vstv %s289
        %v291 = vmul.f32 %v246, %v290
        %s292 = sld [smem:[#allocation2 + $0x101]]
        %v293 = vstv %s292
        %v294 = vmul.f32 %v248, %v293
        %v295 = vadd.f32 %v291, %v294
        %s296 = sld [smem:[#allocation2 + $0x102]]
        %v297 = vstv %s296
        %v298 = vmul.f32 %v250, %v297
        %v299 = vadd.f32 %v295, %v298
        %s300 = sld [smem:[#allocation2 + $0x103]]
        %v301 = vstv %s300
        %v302 = vmul.f32 %v252, %v301
        %v303 = vadd.f32 %v299, %v302
        %s304 = sld [smem:[#allocation5 + $0x2]]
        %v305 = vstv %s304
        %v306 = vadd.f32 %v303, %v305
        %v308 = vperm.slane %v270, 0
        %v309 = vperm.slane %v270, 1
        %v313 = vperm.slane %v288, 0
        %v314 = vperm.slane %v288, 1
        %v318 = vperm.slane %v306, 0
        %v319 = vperm.slane %v306, 1
        %vm322 = vcmask 1040384
        %v323 = vsel %vm322, %v308, %v313
        %v324 = vsel %vm322, %v309, %v314
        %vm325 = vcmask 1041408
        %v326 = vsel %vm325, %v323, %v318
        %v327 = vsel %vm325, %v324, %v319
        %v330 = vrot.slane %v327, 4
        %vm331 = vcmask 1043456
        %v332 = vsel %vm331, %v326, %v330
        %334 = vst [vmem:[%s244] sm:$0x77] %v332
        %s335 = smul.u32 2, %s24
        %p336 = scmp.lt.s32.totalorder %s23, 1
        %s337 = scalar_select %p336, %s23, 1
        %p338 = scmp.lt.s32.totalorder %s335, 1
        %s339 = scalar_select %p338, %s335, 1
        %s340 = smul.addr %s337, 2
        %s341 = sadd.s32 %s339, %s340
        %s342 = smul.addr %s341, 4
        %s343 = scalar_lea.vmem %s3, %s342
        // Predicated region
        $region45: #{tpu_custom_call.1} parent=31 // pred_check
          %p344 = pneg %p121
        $region46: #{tpu_custom_call.1} parent=31 // pred_check_branch
          %346 = sbr.rel (%p344) target = $region48
        $region47: #{tpu_custom_call.1} parent=31 // pred_region
          %s347 = smul.u32 2, %s24
        $region48: #{tpu_custom_call.1} parent=31 // pred_fallthru
          _
      $region32: #{tpu_custom_call.1} parent=5 // pred_fallthru
        _
      %p348 = scmp.le.s32.totalorder 2, %s14
      // Predicated region
      $region49: #{tpu_custom_call.1} parent=5 // pred_check
        %p349 = pneg %p348
      $region50: #{tpu_custom_call.1} parent=5 // pred_check_branch
        %351 = sbr.rel (%p349) target = $region52
      $region51: #{tpu_custom_call.1} parent=5 // pred_region
        %s352 = ssub.s32 %s14, 2
        // Predicated region
        $region53: #{tpu_custom_call.1} parent=51 // pred_check
          %p353 = pneg %p127
        $region54: #{tpu_custom_call.1} parent=51 // pred_check_branch
          %355 = sbr.rel (%p353) target = $region56
        $region55: #{tpu_custom_call.1} parent=51 // pred_region
          %s356 = smul.u32 2, %s26
          %p357 = scmp.lt.s32.totalorder %s25, 1
          %s358 = scalar_select %p357, %s25, 1
          %p359 = scmp.lt.s32.totalorder %s356, 1
          %s360 = scalar_select %p359, %s356, 1
          %s361 = smul.addr %s358, 2
          %s362 = sadd.s32 %s360, %s361
          %s363 = smul.addr %s362, 4
          %s364 = scalar_lea.vmem %s3, %s363
        $region56: #{tpu_custom_call.1} parent=51 // pred_fallthru
          _
      $region52: #{tpu_custom_call.1} parent=5 // pred_fallthru
        _
    $region6: #{tpu_custom_call.1} parent=1 // loop_footer
      %s18 = sadd.s32 1, %s14
    $region7: #{tpu_custom_call.1} parent=1 // loop_footer_branch
      %13 = sbr.rel target = $region3
    $region8: #{tpu_custom_call.1} parent=1 // loop_exit
      _
    %365 = vsyncpa [#allocation3], 1
    %s366 = scalar_lea.sflag [#allocation3], 1
    %367 = vsyncpa %s366, 1
    %368 = vsyncpa [#allocation4], 1
    %s369 = scalar_lea.sflag [#allocation4], 1
    %370 = vsyncpa %s369, 1
    %371 = vsyncpa [#allocation6], 1

</llo_original>
